<compile_context>
chip_gen: v7x
topology: tpu7x:2x2x1
jax: 0.10.0
libtpu: 0.0.40
codegen_flags: <defaults>
</compile_context>

<pallas_src>
import jax
import jax.numpy as jnp
from jax.experimental import pallas as pl
from jax.experimental.pallas import tpu as pltpu


def _se_kernel(x_ref, w_ref, o_ref):
    # x_ref: (BT, C, HW)   current tile of batch elements
    # w_ref: (C, C)        fc2 weight in nn.Linear (out_features, in_features) layout
    # o_ref: (BT, C, HW)
    x = x_ref[...]                                          # (BT, C, HW)

    # Spatial mean == AdaptiveAvgPool2d(1); accumulate in f32.
    mean = jnp.mean(x.astype(jnp.float32), axis=2)          # (BT, C)

    # nn.Linear (no bias): y[b, j] = sum_i mean[b, i] * W[j, i]
    # -> contract the last dim of both operands; no transposes needed.
    y = jax.lax.dot_general(
        mean, w_ref[...].astype(jnp.float32),
        dimension_numbers=(((1,), (1,)), ((), ())),
        preferred_element_type=jnp.float32)                 # (BT, C)

    scale = jax.nn.sigmoid(y).astype(x.dtype)               # (BT, C)
    o_ref[...] = x * scale[:, :, None]                      # broadcast over spatial


# Conservative pipeline-buffer budget (2 input + 2 output buffers of the x tile):
# stays under v5e's 16 MiB default scoped VMEM and well under v7x's 64 MiB physical.
_VMEM_PIPELINE_BUDGET = 12 * 1024 * 1024


def _choose_batch_tile(b, c, hw, itemsize):
    """Largest BT such that the 4 pipeline buffers of (BT, C, HW) fit the budget."""
    per_batch = 4 * c * hw * itemsize
    bt = max(1, _VMEM_PIPELINE_BUDGET // per_batch)
    bt = int(min(bt, b))
    # Keep the grid exactly divisible -> full, unmasked blocks on every step.
    while b % bt != 0:
        bt -= 1
    return bt
    # TODO(synk): if a single (C, H*W) slice ever exceeds the VMEM budget (huge C*HW),
    # split HW across grid steps with a two-pass (accumulate-sum, then rescale) scheme.


def simple_feat_layer_pallas(x_nchw, fc2_weight):
    """x_nchw: (B, C, H, W) float; fc2_weight: (C, C) as in nn.Linear (out, in)."""
    b, c, h, w = x_nchw.shape
    hw = h * w
    x_flat = x_nchw.reshape(b, c, hw)
    itemsize = jnp.dtype(x_flat.dtype).itemsize
    bt = _choose_batch_tile(b, c, hw, itemsize)

    out_flat = pl.pallas_call(
        _se_kernel,
        out_shape=jax.ShapeDtypeStruct((b, c, hw), x_flat.dtype),
        grid_spec=pltpu.PrefetchScalarGridSpec(
            num_scalar_prefetch=0,
            grid=(b // bt,),
            in_specs=[
                pl.BlockSpec((bt, c, hw), lambda i: (i, 0, 0)),
                pl.BlockSpec((c, c), lambda i: (0, 0)),   # grid-invariant weight
            ],
            out_specs=pl.BlockSpec((bt, c, hw), lambda i: (i, 0, 0)),
        ),
        compiler_params=pltpu.CompilerParams(
            dimension_semantics=("parallel",),
            vmem_limit_bytes=32 * 1024 * 1024,
        ),
    )(x_flat, fc2_weight)
    return out_flat.reshape(b, c, h, w)


def _reference(x, fc2_weight):
    y = jnp.mean(x, axis=(2, 3))                 # (B, C)  == AdaptiveAvgPool2d(1)
    y = jax.nn.sigmoid(y @ fc2_weight.T)         # (B, C)
    return x * y[:, :, None, None]


if __name__ == "__main__":
    key = jax.random.PRNGKey(0)
    kx, kw = jax.random.split(key)

    B, C, H, W = 2, 4, 16, 16
    x = jax.random.normal(kx, (B, C, H, W), dtype=jnp.float32)
    # Deterministic fc2 weight (nn.Linear(num_channel, num_channel, bias=False))
    bound = 1.0 / jnp.sqrt(C)
    fc2_w = jax.random.uniform(kw, (C, C), minval=-bound, maxval=bound,
                               dtype=jnp.float32)

    out = simple_feat_layer_pallas(x, fc2_w)
    out = jax.block_until_ready(out)

    ref = _reference(x, fc2_w)
    assert jnp.allclose(out, ref, atol=1e-5, rtol=1e-5), "mismatch vs reference"

    print("KERNEL_OK")
</pallas_src>

<mosaic_0001>
module attributes {stable_mosaic.version = 11 : i64} {
  func.func @_se_kernel(%arg0: i32, %arg1: memref<2x4x256xf32, #tpu.memory_space<vmem>>, %arg2: memref<4x4xf32, #tpu.memory_space<vmem>>, %arg3: memref<2x4x256xf32, #tpu.memory_space<vmem>>) attributes {dimension_semantics = [#tpu.dimension_semantics<parallel>], iteration_bounds = array<i64: 1>, scalar_prefetch = 0 : i64, scratch_operands = 0 : i64, tpu.core_type = #tpu.core_type<tc>, window_params = [{transform_indices = @transform_0, window_bounds = array<i64: 2, 4, 256>}, {pipeline_mode = #tpu.pipeline_mode<synchronous>, transform_indices = @transform_1, window_bounds = array<i64: 4, 4>}, {transform_indices = @transform_2, window_bounds = array<i64: 2, 4, 256>}]} {
    %c0 = arith.constant 0 : index
    %c0_0 = arith.constant 0 : index
    %c0_1 = arith.constant 0 : index
    %0 = vector.load %arg1[%c0, %c0_0, %c0_1] : memref<2x4x256xf32, #tpu.memory_space<vmem>>, vector<2x4x256xf32>
    %cst = arith.constant dense<0.000000e+00> : vector<2x4xf32>
    %1 = vector.multi_reduction <add>, %0, %cst [2] : vector<2x4x256xf32> to vector<2x4xf32>
    %cst_2 = arith.constant 2.560000e+02 : f32
    %2 = vector.broadcast %cst_2 : f32 to vector<2x4xf32>
    %3 = arith.divf %1, %2 : vector<2x4xf32>
    %c0_3 = arith.constant 0 : index
    %c0_4 = arith.constant 0 : index
    %4 = vector.load %arg2[%c0_3, %c0_4] : memref<4x4xf32, #tpu.memory_space<vmem>>, vector<4x4xf32>
    %cst_5 = arith.constant dense<0.000000e+00> : vector<2x4xf32>
    %5 = tpu.matmul %3, %4, %cst_5 {dimension_numbers = #tpu.dot_dimension_numbers<[1], [1], [0], [0], [0, 0, 1, 0], [], []>} : vector<2x4xf32>, vector<4x4xf32>, vector<2x4xf32> -> vector<2x4xf32>
    %6 = arith.negf %5 : vector<2x4xf32>
    %7 = math.exp %6 : vector<2x4xf32>
    %cst_6 = arith.constant 1.000000e+00 : f32
    %8 = vector.broadcast %cst_6 : f32 to vector<2x4xf32>
    %9 = arith.addf %8, %7 : vector<2x4xf32>
    %10 = arith.divf %8, %9 : vector<2x4xf32>
    %11 = vector.shape_cast %10 : vector<2x4xf32> to vector<2x4x1xf32>
    %12 = vector.broadcast %11 : vector<2x4x1xf32> to vector<2x4x256xf32>
    %13 = arith.mulf %0, %12 : vector<2x4x256xf32>
    %c0_7 = arith.constant 0 : index
    %c0_8 = arith.constant 0 : index
    %c0_9 = arith.constant 0 : index
    %14 = vector.load %arg3[%c0_7, %c0_8, %c0_9] : memref<2x4x256xf32, #tpu.memory_space<vmem>>, vector<2x4x256xf32>
    tpu.vector_store %arg3[%c0_7, %c0_8, %c0_9], %13 {strides = array<i32>} : memref<2x4x256xf32, #tpu.memory_space<vmem>>, vector<2x4x256xf32>,
    return
  }
  func.func @transform_0(%arg0: i32) -> (i32, i32, i32) {
    %c0_i32 = arith.constant 0 : i32
    %c0_i32_0 = arith.constant 0 : i32
    %c0_i32_1 = arith.constant 0 : i32
    return %arg0, %c0_i32, %c0_i32_0 : i32, i32, i32
  }
  func.func @transform_1(%arg0: i32) -> (i32, i32) {
    %c0_i32 = arith.constant 0 : i32
    %c0_i32_0 = arith.constant 0 : i32
    %c0_i32_1 = arith.constant 0 : i32
    return %c0_i32, %c0_i32_0 : i32, i32
  }
  func.func @transform_2(%arg0: i32) -> (i32, i32, i32) {
    %c0_i32 = arith.constant 0 : i32
    %c0_i32_0 = arith.constant 0 : i32
    %c0_i32_1 = arith.constant 0 : i32
    return %arg0, %c0_i32, %c0_i32_0 : i32, i32, i32
  }
}

</mosaic_0001>

<llo_original>
// kernel: tpu_custom_call.1
$region0: #{tpu_custom_call.1}
  #allocation0 [shape = 'u32[]', space=smem, size = 0x4, offset = 0x4, fixed_abs, tag = 'smem constant byte address 0x4 - core index']
  #allocation1 [shape = 'u32[144,128]{1,0:T(1,128)}', space=vmem, size = 0x12000, scoped, tag = 'internal scratch']
  %s0 = inlined_call_operand.hbm [shape: f32[2,4,256], index: 0, kind: input, shape index: {}]
  %s1 = inlined_call_operand.hbm [shape: f32[4,4], index: 1, kind: input, shape index: {}]
  %s2 = inlined_call_operand.hbm [shape: f32[2,4,256], index: 2, kind: output, shape index: {}]
  %s3 = sld [smem:[#allocation0]]
  $region26: #{tpu_custom_call.1} parent=0
    _
  %s5 = ssub.s32 1, %s3
  %s6 = scalar_select 0, %s5, %s3
  $region1: #{tpu_custom_call.1} parent=0
    #allocation2 [shape = 'u8[8192]{0}', space=vmem, size = 0x2000, scoped, tag = 'input window, operand 0, single buffered']
    #allocation3 [shape = 's32[1]{0}', space=sflag, size = 0x4, scoped, tag = 'scoped memory for tpu_custom_call.1']
    #allocation4 [shape = 's32[1]{0}', space=sflag, size = 0x4, scoped, tag = 'scoped memory for tpu_custom_call.1']
    #allocation5 [shape = 'u8[2048]{0}', space=vmem, size = 0x800, scoped, tag = 'input window, operand 1, single buffered']
    #allocation6 [shape = 's32[1]{0}', space=sflag, size = 0x4, scoped, tag = 'scoped memory for tpu_custom_call.1']
    #allocation7 [shape = 'u8[8192]{0}', space=vmem, size = 0x2000, scoped, tag = 'output window, operand 0, single buffered']
    %7 = vsyncpa [#allocation3], 0
    %8 = vsyncpa [#allocation6], 0
    %9 = vsyncpa [#allocation4], 0
    // Predicated region
    $region2: #{tpu_custom_call.1} parent=1 // pred_check
      _
    $region3: #{tpu_custom_call.1} parent=1 // pred_check_branch
      %11 = sbr.rel (0) target = $region5
    $region4: #{tpu_custom_call.1} parent=1 // pred_region
      %s13 = ssub.s32 256, 256
      %14 = vsyncadd [#allocation3], %s13
      %s15 = sshll.u32 [#allocation2], 4
      %s16 = int_to_ptr.vmem [resolvable:$true] %s15
      %21 = dma.hbm_to_vmem [thread:$0]  %s0, 256, %s16, [#allocation3], 128, 128, 8
    $region5: #{tpu_custom_call.1} parent=1 // pred_fallthru
      _
    // Predicated region
    $region6: #{tpu_custom_call.1} parent=1 // pred_check
      _
    $region7: #{tpu_custom_call.1} parent=1 // pred_check_branch
      %23 = sbr.rel (0) target = $region9
    $region8: #{tpu_custom_call.1} parent=1 // pred_region
      %s25 = ssub.s32 64, 64
      %26 = vsyncadd [#allocation6], %s25
      %s28 = sshll.u32 [#allocation5], 4
      %s29 = int_to_ptr.vmem [resolvable:$true] %s28
      %31 = dma.hbm_to_vmem [thread:$0]  %s1, 64, %s29, [#allocation6]
    $region9: #{tpu_custom_call.1} parent=1 // pred_fallthru
      _
    // Predicated region
    $region10: #{tpu_custom_call.1} parent=1 // pred_check
      _
    $region11: #{tpu_custom_call.1} parent=1 // pred_check_branch
      %33 = sbr.rel (0) target = $region13
    $region12: #{tpu_custom_call.1} parent=1 // pred_region
      %34 = dma.done [#allocation3], 256
    $region13: #{tpu_custom_call.1} parent=1 // pred_fallthru
      _
    // Predicated region
    $region14: #{tpu_custom_call.1} parent=1 // pred_check
      _
    $region15: #{tpu_custom_call.1} parent=1 // pred_check_branch
      %36 = sbr.rel (0) target = $region17
    $region16: #{tpu_custom_call.1} parent=1 // pred_region
      %37 = dma.done [#allocation6], 64
    $region17: #{tpu_custom_call.1} parent=1 // pred_fallthru
      _
    %v38 = vld [vmem:[#allocation2] sm:$0xff]
    %v39 = vld [vmem:[#allocation2 + $0x8] sm:$0xff]
    %v42 = vcombine.high %v38, %v38
    %v43 = vcombine.high %v39, %v39
    %vm46 = vcmask 1043456
    %v47 = vsel %vm46, %v38, 0.0
    %v48 = vsel %vm46, %v42, 0.0
    %v49 = vadd.f32 %v47, %v48
    %50 = vadd.xlane.f32.xlu0 %v49
    %v51 = vpop.xlane.xlu0 %50
    %v52 = vsel %vm46, %v39, 0.0
    %v53 = vsel %vm46, %v43, 0.0
    %v54 = vadd.f32 %v52, %v53
    %55 = vadd.xlane.f32.xlu0 %v54
    %v56 = vpop.xlane.xlu0 %55
    %v57 = vrcp.pop 256.0
    %v58 = vmul.f32 %v51, %v57
    %v59 = vmul.f32 %v56, %v57
    %v60 = vld [vmem:[#allocation5] sm:$0xf]
    %v63 = vlaneseq
    %v64 = vand.u32 %v63, 127
    %v65 = vlaneseq
    %v66 = vshrl.u32 %v65, 7
    %v67 = vsub.s32 %v64, %v66
    %v68 = vrot.slane %v58, %v67
    %v69 = vlaneseq
    %v70 = vshrl.u32 %v69, 7
    %v71 = vsub.s32 %v64, %v70
    %v72 = vrot.slane %v59, %v71
    %vm73 = vcmask 1041409
    %v74 = vsel %vm73, %v72, %v68
    %vm75 = vcmask 31744
    %v76 = vsel %vm75, %v74, 0
    %v79 = vsel %vm75, %v60, 0
    %81 = vmatprep.subr.mxu0 0.0
    %82 = vmatpush1.xpose.msra.mxu0 %v79
    %83 = vmatprep.subr.mxu0 0.0
    %84 = vmatpush1.xpose.msra.mxu0 0.0
    %85 = vmatprep.subr.mxu0 0.0
    %86 = vmatpush1.xpose.msra.mxu0 0.0
    %87 = vmatprep.subr.mxu0 0.0
    %88 = vmatpush1.xpose.msra.mxu0 0.0
    %89 = vmatprep.subr.mxu0 0.0
    %90 = vmatpush1.xpose.msra.mxu0 0.0
    %91 = vmatprep.subr.mxu0 0.0
    %92 = vmatpush1.xpose.msra.mxu0 0.0
    %93 = vmatprep.subr.mxu0 0.0
    %94 = vmatpush1.xpose.msra.mxu0 0.0
    %95 = vmatprep.subr.mxu0 0.0
    %96 = vmatpush1.xpose.msra.mxu0 0.0
    %97 = vmatprep.subr.mxu0 0.0
    %98 = vmatpush1.xpose.msra.mxu0 0.0
    %99 = vmatprep.subr.mxu0 0.0
    %100 = vmatpush1.xpose.msra.mxu0 0.0
    %101 = vmatprep.subr.mxu0 0.0
    %102 = vmatpush1.xpose.msra.mxu0 0.0
    %103 = vmatprep.subr.mxu0 0.0
    %104 = vmatpush1.xpose.msra.mxu0 0.0
    %105 = vmatprep.subr.mxu0 0.0
    %106 = vmatpush1.xpose.msra.mxu0 0.0
    %107 = vmatprep.subr.mxu0 0.0
    %108 = vmatpush1.xpose.msra.mxu0 0.0
    %109 = vmatprep.subr.mxu0 0.0
    %110 = vmatpush1.xpose.msra.mxu0 0.0
    %111 = vmatprep.subr.mxu0 0.0
    %112 = vmatpush1.xpose.msra.mxu0 0.0
    %113 = vmatprep.subr.mxu0 0.0
    %114 = vmatpush1.xpose.msra.mxu0 0.0
    %115 = vmatprep.subr.mxu0 0.0
    %116 = vmatpush1.xpose.msra.mxu0 0.0
    %117 = vmatprep.subr.mxu0 0.0
    %118 = vmatpush1.xpose.msra.mxu0 0.0
    %119 = vmatprep.subr.mxu0 0.0
    %120 = vmatpush1.xpose.msra.mxu0 0.0
    %121 = vmatprep.subr.mxu0 0.0
    %122 = vmatpush1.xpose.msra.mxu0 0.0
    %123 = vmatprep.subr.mxu0 0.0
    %124 = vmatpush1.xpose.msra.mxu0 0.0
    %125 = vmatprep.subr.mxu0 0.0
    %126 = vmatpush1.xpose.msra.mxu0 0.0
    %127 = vmatprep.subr.mxu0 0.0
    %128 = vmatpush1.xpose.msra.mxu0 0.0
    %129 = vmatprep.subr.mxu0 0.0
    %130 = vmatpush1.xpose.msra.mxu0 0.0
    %131 = vmatprep.subr.mxu0 0.0
    %132 = vmatpush1.xpose.msra.mxu0 0.0
    %133 = vmatprep.subr.mxu0 0.0
    %134 = vmatpush1.xpose.msra.mxu0 0.0
    %135 = vmatprep.subr.mxu0 0.0
    %136 = vmatpush1.xpose.msra.mxu0 0.0
    %137 = vmatprep.subr.mxu0 0.0
    %138 = vmatpush1.xpose.msra.mxu0 0.0
    %139 = vmatprep.subr.mxu0 0.0
    %140 = vmatpush1.xpose.msra.mxu0 0.0
    %141 = vmatprep.subr.mxu0 0.0
    %142 = vmatpush1.xpose.msra.mxu0 0.0
    %143 = vmatprep.subr.mxu0 0.0
    %144 = vmatpush1.xpose.msra.mxu0 0.0
    %145 = vmatprep.mubr.f32.mxu0 0.0
    %146 = vmatmul.mubr.f32.gmra.mrb[0].mxu0 %v76
    %v147 = vpop.f32.mrb[0].mxu0
    %v148 = vadd.f32 0.0, %v147
    %v149 = vpop.f32.mrb[0].mxu0
    %150 = vdwg.mxu0
    %v151 = vxor.u32 %v148, 2147483648
    %v152 = vmul.f32 %v151, 1.442695
    %v153 = vpow.pop %v152
    %v154 = vadd.f32 %v153, 1.0
    %v155 = vrcp.pop %v154
    %v156 = vmul.f32 1.0, %v155
    %v157 = vlaneseq
    %v158 = vshrl.u32 %v157, 7
    %v159 = vsub.s32 0, %v158
    %v160 = vrot.slane %v156, %v159
    %162 = vbcast.lane.b32.xlu0 %v160, 256
    %v163 = vpop.permute.xlu0 %162
    %v164 = vlaneseq
    %v165 = vshrl.u32 %v164, 7
    %v166 = vsub.s32 1, %v165
    %v167 = vrot.slane %v156, %v166
    %169 = vbcast.lane.b32.xlu0 %v167, 256
    %v170 = vpop.permute.xlu0 %169
    %v174 = vunpack.c.l.s4 839922192
    %v175 = vunpack.c.0.s8 %v174
    %v176 = vlaneseq
    %v177 = vshrl.u32 %v176, 7
    %v178 = vsub.s32 %v175, %v177
    %v179 = vrot.slane %v163, %v178
    %v181 = vunpack.c.l.s4 839922192
    %v182 = vunpack.c.0.s8 %v181
    %v183 = vlaneseq
    %v184 = vshrl.u32 %v183, 7
    %v185 = vsub.s32 %v182, %v184
    %v186 = vrot.slane %v170, %v185
    %v189 = vmul.f32 %v38, %v179
    %v190 = vmul.f32 %v39, %v186
    %191 = vst [vmem:[#allocation7] sm:$0xff] %v189
    %192 = vst [vmem:[#allocation7 + $0x8] sm:$0xff] %v190
    // Predicated region
    $region18: #{tpu_custom_call.1} parent=1 // pred_check
      _
    $region19: #{tpu_custom_call.1} parent=1 // pred_check_branch
      %194 = sbr.rel (0) target = $region21
    $region20: #{tpu_custom_call.1} parent=1 // pred_region
      %s196 = ssub.s32 256, 256
      %197 = vsyncadd [#allocation4], %s196
      %s198 = sshll.u32 [#allocation7], 4
      %s199 = int_to_ptr.vmem [resolvable:$true] %s198
      %204 = dma.vmem_to_hbm [thread:$0]  %s199, 256, %s2, [#allocation4], 128, 128, 8
    $region21: #{tpu_custom_call.1} parent=1 // pred_fallthru
      _
    // Predicated region
    $region22: #{tpu_custom_call.1} parent=1 // pred_check
      _
    $region23: #{tpu_custom_call.1} parent=1 // pred_check_branch
      %206 = sbr.rel (0) target = $region25
    $region24: #{tpu_custom_call.1} parent=1 // pred_region
      %207 = dma.done [#allocation4], 256
    $region25: #{tpu_custom_call.1} parent=1 // pred_fallthru
      _
    %208 = vsyncpa [#allocation3], 1
    %209 = vsyncpa [#allocation6], 1
    %210 = vsyncpa [#allocation4], 1

</llo_original>
